<compile_context>
chip_gen: v5e
topology: v5e:2x2
jax: 0.10.0
libtpu: 0.0.40
codegen_flags: <defaults>
</compile_context>

<pallas_src>
import functools

import numpy as np
import jax
import jax.numpy as jnp
from jax import lax
from jax.experimental import pallas as pl
from jax.experimental.pallas import tpu as pltpu

BN_EPS = 1e-5
TAP_STRIDE = 8           # Cin padded to 8 sublanes per tap -> pure vreg placement
# Set to jnp.bfloat16 on v6e/v7x for native-MXU inputs (f32 accumulation kept);
# f32 default keeps the 1e-3 self-check exact and is safe on v5e.
DOT_DTYPE = jnp.float32


def _build_tap_masks(n, h, w):
    """Host-side (numpy) zero-padding boundary masks, one row per 3x3 tap.

    masks[t, p] == 1.0 iff tap t = (kh, kw) at flattened position p stays inside
    the (zero-)padded plane. The same masks also kill every cross-row /
    cross-image wraparound position produced by the in-kernel lane roll.
    """
    hw = h * w
    hh = np.arange(hw) // w
    ww = np.arange(hw) % w
    masks = np.ones((9, hw), np.float32)
    for kh in range(3):
        for kw in range(3):
            t = kh * 3 + kw
            oh, ow = kh - 1, kw - 1
            m = np.ones(hw, bool)
            if oh < 0:
                m &= hh >= -oh
            if oh > 0:
                m &= hh < h - oh
            if ow < 0:
                m &= ww >= -ow
            if ow > 0:
                m &= ww < w - ow
            masks[t] = m.astype(np.float32)
    return np.tile(masks, (1, n))  # [9, n*hw]


def _make_subnet_kernel(n, cin, cout, h, w):
    hw = h * w
    nhw = n * hw

    def kernel(x_ref, wp_ref, gb_ref, mask_ref, o_ref, stack_ref):
        # x_ref:    [N, Cin, H*W]        NCHW input, spatial flattened (lane-dense)
        # wp_ref:   [Cout, 9*8]          conv weight packed tap-major, Cin padded to 8
        # gb_ref:   [Cout, 2]            packed (gamma, beta)
        # mask_ref: [9, N*H*W]           precomputed boundary masks (f32 0/1)
        # o_ref:    [N, Cout, H*W]       output, NCHW order, lane-dense last dim
        # stack_ref:[9*8, N*H*W] scratch stacked-tap operand for the single MXU dot

        # Stitch the batch along lanes -> [Cin, N*H*W]; slices are 128-aligned.
        x2 = jnp.concatenate([x_ref[b] for b in range(n)], axis=1)

        # Zero the padded rows of the stacked-tap operand once (cheap, and makes
        # the zero weight columns irrelevant even for NaN garbage in VMEM).
        stack_ref[...] = jnp.zeros_like(stack_ref)

        # Build the [72, N*HW] stacked-tap operand: lane roll + precomputed mask.
        for kh in range(3):
            for kw in range(3):
                t = kh * 3 + kw
                d = (kh - 1) * w + (kw - 1)
                # tap[ci, p] = x2[ci, p + d]  (lane rotation on the XLU)
                tap = x2 if d == 0 else pltpu.roll(x2, shift=(-d) % nhw, axis=1)
                if d != 0:  # center tap needs no boundary mask
                    tap = tap * mask_ref[t:t + 1, :]
                stack_ref[t * TAP_STRIDE:t * TAP_STRIDE + cin, :] = (
                    tap.astype(stack_ref.dtype)
                )

        # Single MXU matmul: [Cout, 72] @ [72, N*HW] with f32 accumulation.
        acc = jnp.dot(wp_ref[...], stack_ref[...],
                      preferred_element_type=jnp.float32)
        # NOTE: conv bias omitted on purpose — cancelled by the BN mean below.

        # BatchNorm2d (training mode): batch stats over (N,H,W) per channel,
        # biased variance, eps=1e-5. Two-pass (centered) variance for safety.
        inv_cnt = 1.0 / float(nhw)
        mean = jnp.sum(acc, axis=1, keepdims=True) * inv_cnt           # [Cout, 1]
        centered = acc - mean
        var = jnp.sum(centered * centered, axis=1, keepdims=True) * inv_cnt
        gamma = gb_ref[:, 0:1]
        beta = gb_ref[:, 1:2]
        scale = gamma * lax.rsqrt(var + BN_EPS)
        y = jnp.maximum(centered * scale + beta, 0.0)                  # fused BN + ReLU

        # Lane-dense store, already in NCHW order (256-lane aligned slices).
        for b in range(n):
            o_ref[b] = y[:, b * hw:(b + 1) * hw]

    return kernel


def prepare_subnet_params(conv_w, conv_b, bn_gamma, bn_beta, dot_dtype=DOT_DTYPE):
    """One-time parameter repacking (hoisted out of the per-forward path)."""
    Cout, Cin, KH, KW = conv_w.shape
    assert (KH, KW) == (3, 3)
    # tap-major [9, Cout, Cin] -> pad Cin to 8 -> [Cout, 72]
    w9 = jnp.transpose(conv_w.astype(jnp.float32), (2, 3, 0, 1)).reshape(
        KH * KW, Cout, Cin)
    w9p = jnp.pad(w9, ((0, 0), (0, 0), (0, TAP_STRIDE - Cin)))
    w_packed = jnp.transpose(w9p, (1, 0, 2)).reshape(
        Cout, KH * KW * TAP_STRIDE).astype(dot_dtype)
    # Conv bias is mathematically cancelled by the training-mode BN mean
    # subtraction, so it is not fed to the kernel (zero numerical change).
    del conv_b
    gb = jnp.stack([bn_gamma, bn_beta], axis=1).astype(jnp.float32)   # [Cout, 2]
    return w_packed, gb


@jax.jit
def subnet_forward(x_nchw, w_packed, gb):
    """x_nchw: [N, Cin, H, W]; w_packed: [Cout, 72]; gb: [Cout, 2]."""
    N, Cin, H, W = x_nchw.shape
    Cout = w_packed.shape[0]
    assert w_packed.shape[1] == 9 * TAP_STRIDE
    nhw = N * H * W

    # Pure reshape — no wrapper transposes, no XLA im2col.
    x3 = x_nchw.reshape(N, Cin, H * W).astype(jnp.float32)
    # Boundary masks: numpy, built at trace time -> compiled-in constant.
    masks = jnp.asarray(_build_tap_masks(N, H, W))                     # [9, N*HW]

    kernel = _make_subnet_kernel(N, Cin, Cout, H, W)
    out = pl.pallas_call(
        kernel,
        out_shape=jax.ShapeDtypeStruct((N, Cout, H * W), jnp.float32),
        in_specs=[
            pl.BlockSpec(memory_space=pltpu.MemorySpace.VMEM),
            pl.BlockSpec(memory_space=pltpu.MemorySpace.VMEM),
            pl.BlockSpec(memory_space=pltpu.MemorySpace.VMEM),
            pl.BlockSpec(memory_space=pltpu.MemorySpace.VMEM),
        ],
        out_specs=pl.BlockSpec(memory_space=pltpu.MemorySpace.VMEM),
        scratch_shapes=[pltpu.VMEM((9 * TAP_STRIDE, nhw), DOT_DTYPE)],
    )(x3, w_packed, gb, masks)

    # Already NCHW order; pure reshape, no transpose kernel.
    return out.reshape(N, Cout, H, W)


def _reference(x, conv_w, conv_b, bn_gamma, bn_beta):
    """Pure-JAX reference (conv WITH bias + training-mode BN + ReLU)."""
    Cout = conv_w.shape[0]
    y = lax.conv_general_dilated(
        x, conv_w, window_strides=(1, 1), padding=((1, 1), (1, 1)),
        dimension_numbers=("NCHW", "OIHW", "NCHW"),
    ) + conv_b.reshape(1, Cout, 1, 1)
    mu = jnp.mean(y, axis=(0, 2, 3), keepdims=True)
    var = jnp.mean((y - mu) ** 2, axis=(0, 2, 3), keepdims=True)
    y = (y - mu) * lax.rsqrt(var + BN_EPS)
    y = y * bn_gamma.reshape(1, Cout, 1, 1) + bn_beta.reshape(1, Cout, 1, 1)
    return jnp.maximum(y, 0.0)


if __name__ == "__main__":
    key = jax.random.PRNGKey(0)
    k_x, k_w, k_b, k_g, k_beta = jax.random.split(key, 5)

    N, Cin, H, W = 2, 5, 16, 16
    Cout, KH, KW = 5, 3, 3

    x = jax.random.normal(k_x, (N, Cin, H, W), dtype=jnp.float32)
    # Deterministic synthetic parameters (shapes match torch.nn.Conv2d(5,5,3,1,1)
    # and torch.nn.BatchNorm2d(5)).
    fan_in = Cin * KH * KW
    bound = 1.0 / float(np.sqrt(fan_in))
    conv_w = jax.random.uniform(k_w, (Cout, Cin, KH, KW), jnp.float32, -bound, bound)
    conv_b = jax.random.uniform(k_b, (Cout,), jnp.float32, -bound, bound)
    bn_gamma = 1.0 + 0.1 * jax.random.normal(k_g, (Cout,), jnp.float32)
    bn_beta = 0.1 * jax.random.normal(k_beta, (Cout,), jnp.float32)

    # One-time parameter repacking, paid once (not per forward call).
    w_packed, gb = jax.block_until_ready(
        prepare_subnet_params(conv_w, conv_b, bn_gamma, bn_beta))

    out = subnet_forward(x, w_packed, gb)
    out = jax.block_until_ready(out)
    assert out.shape == (N, Cout, H, W)

    ref = _reference(x, conv_w, conv_b, bn_gamma, bn_beta)
    max_err = float(jnp.max(jnp.abs(out - ref)))
    assert max_err < 1e-3, f"max abs error vs reference: {max_err}"

    print("KERNEL_OK")
</pallas_src>

<mosaic_0001>
module attributes {stable_mosaic.version = 11 : i64} {
  func.func @kernel(%arg0: memref<2x5x256xf32, #tpu.memory_space<vmem>>, %arg1: memref<5x72xf32, #tpu.memory_space<vmem>>, %arg2: memref<5x2xf32, #tpu.memory_space<vmem>>, %arg3: memref<9x512xf32, #tpu.memory_space<vmem>>, %arg4: memref<2x5x256xf32, #tpu.memory_space<vmem>>, %arg5: memref<72x512xf32, #tpu.memory_space<vmem>>) attributes {dimension_semantics = [], scalar_prefetch = 0 : i64, scratch_operands = 1 : i64, tpu.core_type = #tpu.core_type<tc>} {
    %c0 = arith.constant 0 : index
    %c0_0 = arith.constant 0 : index
    %c0_1 = arith.constant 0 : index
    %0 = vector.load %arg0[%c0, %c0_0, %c0_1] : memref<2x5x256xf32, #tpu.memory_space<vmem>>, vector<1x5x256xf32>
    %1 = vector.shape_cast %0 : vector<1x5x256xf32> to vector<5x256xf32>
    %c1 = arith.constant 1 : index
    %c0_2 = arith.constant 0 : index
    %c0_3 = arith.constant 0 : index
    %2 = vector.load %arg0[%c1, %c0_2, %c0_3] : memref<2x5x256xf32, #tpu.memory_space<vmem>>, vector<1x5x256xf32>
    %3 = vector.shape_cast %2 : vector<1x5x256xf32> to vector<5x256xf32>
    %4 = tpu.concatenate %1, %3 in 1 : vector<5x256xf32>, vector<5x256xf32> -> vector<5x512xf32>
    %cst = arith.constant 0.000000e+00 : f32
    %5 = vector.broadcast %cst : f32 to vector<72x512xf32>
    %c0_4 = arith.constant 0 : index
    %c0_5 = arith.constant 0 : index
    %6 = vector.load %arg5[%c0_4, %c0_5] : memref<72x512xf32, #tpu.memory_space<vmem>>, vector<72x512xf32>
    tpu.vector_store %arg5[%c0_4, %c0_5], %5 {strides = array<i32>} : memref<72x512xf32, #tpu.memory_space<vmem>>, vector<72x512xf32>,
    %c17_i32 = arith.constant 17 : i32
    %7 = tpu.dynamic_rotate %4 by %c17_i32 dim 1 : vector<5x512xf32>, i32 -> vector<5x512xf32>
    %c0_6 = arith.constant 0 : index
    %c0_7 = arith.constant 0 : index
    %8 = vector.load %arg3[%c0_6, %c0_7] : memref<9x512xf32, #tpu.memory_space<vmem>>, vector<1x512xf32>
    %9 = vector.broadcast %8 : vector<1x512xf32> to vector<5x512xf32>
    %10 = arith.mulf %7, %9 : vector<5x512xf32>
    %c0_8 = arith.constant 0 : index
    %c0_9 = arith.constant 0 : index
    %11 = vector.load %arg5[%c0_8, %c0_9] : memref<72x512xf32, #tpu.memory_space<vmem>>, vector<5x512xf32>
    tpu.vector_store %arg5[%c0_8, %c0_9], %10 {strides = array<i32>} : memref<72x512xf32, #tpu.memory_space<vmem>>, vector<5x512xf32>,
    %c16_i32 = arith.constant 16 : i32
    %12 = tpu.dynamic_rotate %4 by %c16_i32 dim 1 : vector<5x512xf32>, i32 -> vector<5x512xf32>
    %c1_10 = arith.constant 1 : index
    %c0_11 = arith.constant 0 : index
    %13 = vector.load %arg3[%c1_10, %c0_11] : memref<9x512xf32, #tpu.memory_space<vmem>>, vector<1x512xf32>
    %14 = vector.broadcast %13 : vector<1x512xf32> to vector<5x512xf32>
    %15 = arith.mulf %12, %14 : vector<5x512xf32>
    %c8 = arith.constant 8 : index
    %c0_12 = arith.constant 0 : index
    %16 = vector.load %arg5[%c8, %c0_12] : memref<72x512xf32, #tpu.memory_space<vmem>>, vector<5x512xf32>
    tpu.vector_store %arg5[%c8, %c0_12], %15 {strides = array<i32>} : memref<72x512xf32, #tpu.memory_space<vmem>>, vector<5x512xf32>,
    %c15_i32 = arith.constant 15 : i32
    %17 = tpu.dynamic_rotate %4 by %c15_i32 dim 1 : vector<5x512xf32>, i32 -> vector<5x512xf32>
    %c2 = arith.constant 2 : index
    %c0_13 = arith.constant 0 : index
    %18 = vector.load %arg3[%c2, %c0_13] : memref<9x512xf32, #tpu.memory_space<vmem>>, vector<1x512xf32>
    %19 = vector.broadcast %18 : vector<1x512xf32> to vector<5x512xf32>
    %20 = arith.mulf %17, %19 : vector<5x512xf32>
    %c16 = arith.constant 16 : index
    %c0_14 = arith.constant 0 : index
    %21 = vector.load %arg5[%c16, %c0_14] : memref<72x512xf32, #tpu.memory_space<vmem>>, vector<5x512xf32>
    tpu.vector_store %arg5[%c16, %c0_14], %20 {strides = array<i32>} : memref<72x512xf32, #tpu.memory_space<vmem>>, vector<5x512xf32>,
    %c1_i32 = arith.constant 1 : i32
    %22 = tpu.dynamic_rotate %4 by %c1_i32 dim 1 : vector<5x512xf32>, i32 -> vector<5x512xf32>
    %c3 = arith.constant 3 : index
    %c0_15 = arith.constant 0 : index
    %23 = vector.load %arg3[%c3, %c0_15] : memref<9x512xf32, #tpu.memory_space<vmem>>, vector<1x512xf32>
    %24 = vector.broadcast %23 : vector<1x512xf32> to vector<5x512xf32>
    %25 = arith.mulf %22, %24 : vector<5x512xf32>
    %c24 = arith.constant 24 : index
    %c0_16 = arith.constant 0 : index
    %26 = vector.load %arg5[%c24, %c0_16] : memref<72x512xf32, #tpu.memory_space<vmem>>, vector<5x512xf32>
    tpu.vector_store %arg5[%c24, %c0_16], %25 {strides = array<i32>} : memref<72x512xf32, #tpu.memory_space<vmem>>, vector<5x512xf32>,
    %c32 = arith.constant 32 : index
    %c0_17 = arith.constant 0 : index
    %27 = vector.load %arg5[%c32, %c0_17] : memref<72x512xf32, #tpu.memory_space<vmem>>, vector<5x512xf32>
    tpu.vector_store %arg5[%c32, %c0_17], %4 {strides = array<i32>} : memref<72x512xf32, #tpu.memory_space<vmem>>, vector<5x512xf32>,
    %c511_i32 = arith.constant 511 : i32
    %28 = tpu.dynamic_rotate %4 by %c511_i32 dim 1 : vector<5x512xf32>, i32 -> vector<5x512xf32>
    %c5 = arith.constant 5 : index
    %c0_18 = arith.constant 0 : index
    %29 = vector.load %arg3[%c5, %c0_18] : memref<9x512xf32, #tpu.memory_space<vmem>>, vector<1x512xf32>
    %30 = vector.broadcast %29 : vector<1x512xf32> to vector<5x512xf32>
    %31 = arith.mulf %28, %30 : vector<5x512xf32>
    %c40 = arith.constant 40 : index
    %c0_19 = arith.constant 0 : index
    %32 = vector.load %arg5[%c40, %c0_19] : memref<72x512xf32, #tpu.memory_space<vmem>>, vector<5x512xf32>
    tpu.vector_store %arg5[%c40, %c0_19], %31 {strides = array<i32>} : memref<72x512xf32, #tpu.memory_space<vmem>>, vector<5x512xf32>,
    %c497_i32 = arith.constant 497 : i32
    %33 = tpu.dynamic_rotate %4 by %c497_i32 dim 1 : vector<5x512xf32>, i32 -> vector<5x512xf32>
    %c6 = arith.constant 6 : index
    %c0_20 = arith.constant 0 : index
    %34 = vector.load %arg3[%c6, %c0_20] : memref<9x512xf32, #tpu.memory_space<vmem>>, vector<1x512xf32>
    %35 = vector.broadcast %34 : vector<1x512xf32> to vector<5x512xf32>
    %36 = arith.mulf %33, %35 : vector<5x512xf32>
    %c48 = arith.constant 48 : index
    %c0_21 = arith.constant 0 : index
    %37 = vector.load %arg5[%c48, %c0_21] : memref<72x512xf32, #tpu.memory_space<vmem>>, vector<5x512xf32>
    tpu.vector_store %arg5[%c48, %c0_21], %36 {strides = array<i32>} : memref<72x512xf32, #tpu.memory_space<vmem>>, vector<5x512xf32>,
    %c496_i32 = arith.constant 496 : i32
    %38 = tpu.dynamic_rotate %4 by %c496_i32 dim 1 : vector<5x512xf32>, i32 -> vector<5x512xf32>
    %c7 = arith.constant 7 : index
    %c0_22 = arith.constant 0 : index
    %39 = vector.load %arg3[%c7, %c0_22] : memref<9x512xf32, #tpu.memory_space<vmem>>, vector<1x512xf32>
    %40 = vector.broadcast %39 : vector<1x512xf32> to vector<5x512xf32>
    %41 = arith.mulf %38, %40 : vector<5x512xf32>
    %c56 = arith.constant 56 : index
    %c0_23 = arith.constant 0 : index
    %42 = vector.load %arg5[%c56, %c0_23] : memref<72x512xf32, #tpu.memory_space<vmem>>, vector<5x512xf32>
    tpu.vector_store %arg5[%c56, %c0_23], %41 {strides = array<i32>} : memref<72x512xf32, #tpu.memory_space<vmem>>, vector<5x512xf32>,
    %c495_i32 = arith.constant 495 : i32
    %43 = tpu.dynamic_rotate %4 by %c495_i32 dim 1 : vector<5x512xf32>, i32 -> vector<5x512xf32>
    %c8_24 = arith.constant 8 : index
    %c0_25 = arith.constant 0 : index
    %44 = vector.load %arg3[%c8_24, %c0_25] : memref<9x512xf32, #tpu.memory_space<vmem>>, vector<1x512xf32>
    %45 = vector.broadcast %44 : vector<1x512xf32> to vector<5x512xf32>
    %46 = arith.mulf %43, %45 : vector<5x512xf32>
    %c64 = arith.constant 64 : index
    %c0_26 = arith.constant 0 : index
    %47 = vector.load %arg5[%c64, %c0_26] : memref<72x512xf32, #tpu.memory_space<vmem>>, vector<5x512xf32>
    tpu.vector_store %arg5[%c64, %c0_26], %46 {strides = array<i32>} : memref<72x512xf32, #tpu.memory_space<vmem>>, vector<5x512xf32>,
    %c0_27 = arith.constant 0 : index
    %c0_28 = arith.constant 0 : index
    %48 = vector.load %arg1[%c0_27, %c0_28] : memref<5x72xf32, #tpu.memory_space<vmem>>, vector<5x72xf32>
    %c0_29 = arith.constant 0 : index
    %c0_30 = arith.constant 0 : index
    %49 = vector.load %arg5[%c0_29, %c0_30] : memref<72x512xf32, #tpu.memory_space<vmem>>, vector<72x512xf32>
    %cst_31 = arith.constant dense<0.000000e+00> : vector<5x512xf32>
    %50 = tpu.matmul %48, %49, %cst_31 {dimension_numbers = #tpu.dot_dimension_numbers<[1], [0], [0], [1], [0, 0, 1, 1], [], []>} : vector<5x72xf32>, vector<72x512xf32>, vector<5x512xf32> -> vector<5x512xf32>
    %cst_32 = arith.constant dense<0.000000e+00> : vector<5xf32>
    %51 = vector.multi_reduction <add>, %50, %cst_32 [1] : vector<5x512xf32> to vector<5xf32>
    %52 = vector.shape_cast %51 : vector<5xf32> to vector<5x1xf32>
    %cst_33 = arith.constant 0.001953125 : f32
    %53 = vector.broadcast %cst_33 : f32 to vector<5x1xf32>
    %54 = arith.mulf %52, %53 : vector<5x1xf32>
    %55 = vector.broadcast %54 : vector<5x1xf32> to vector<5x512xf32>
    %56 = arith.subf %50, %55 : vector<5x512xf32>
    %57 = arith.mulf %56, %56 : vector<5x512xf32>
    %cst_34 = arith.constant dense<0.000000e+00> : vector<5xf32>
    %58 = vector.multi_reduction <add>, %57, %cst_34 [1] : vector<5x512xf32> to vector<5xf32>
    %59 = vector.shape_cast %58 : vector<5xf32> to vector<5x1xf32>
    %cst_35 = arith.constant 0.001953125 : f32
    %60 = vector.broadcast %cst_35 : f32 to vector<5x1xf32>
    %61 = arith.mulf %59, %60 : vector<5x1xf32>
    %c0_36 = arith.constant 0 : index
    %c0_37 = arith.constant 0 : index
    %62 = vector.load %arg2[%c0_36, %c0_37] : memref<5x2xf32, #tpu.memory_space<vmem>>, vector<5x1xf32>
    %c0_38 = arith.constant 0 : index
    %c1_39 = arith.constant 1 : index
    %63 = vector.load %arg2[%c0_38, %c1_39] : memref<5x2xf32, #tpu.memory_space<vmem>>, vector<5x1xf32>
    %cst_40 = arith.constant 9.99999974E-6 : f32
    %64 = vector.broadcast %cst_40 : f32 to vector<5x1xf32>
    %65 = arith.addf %61, %64 : vector<5x1xf32>
    %66 = math.rsqrt %65 : vector<5x1xf32>
    %67 = arith.mulf %62, %66 : vector<5x1xf32>
    %68 = vector.broadcast %67 : vector<5x1xf32> to vector<5x512xf32>
    %69 = arith.mulf %56, %68 : vector<5x512xf32>
    %70 = vector.broadcast %63 : vector<5x1xf32> to vector<5x512xf32>
    %71 = arith.addf %69, %70 : vector<5x512xf32>
    %cst_41 = arith.constant 0.000000e+00 : f32
    %72 = vector.broadcast %cst_41 : f32 to vector<5x512xf32>
    %73 = arith.maximumf %71, %72 : vector<5x512xf32>
    %74 = vector.extract_strided_slice %73 {offsets = [0, 0], sizes = [5, 256], strides = [1, 1]} : vector<5x512xf32> to vector<5x256xf32>
    %c0_42 = arith.constant 0 : index
    %c0_43 = arith.constant 0 : index
    %c0_44 = arith.constant 0 : index
    %75 = vector.load %arg4[%c0_42, %c0_43, %c0_44] : memref<2x5x256xf32, #tpu.memory_space<vmem>>, vector<1x5x256xf32>
    %76 = vector.shape_cast %75 : vector<1x5x256xf32> to vector<5x256xf32>
    %77 = vector.shape_cast %74 : vector<5x256xf32> to vector<1x5x256xf32>
    tpu.vector_store %arg4[%c0_42, %c0_43, %c0_44], %77 {strides = array<i32>} : memref<2x5x256xf32, #tpu.memory_space<vmem>>, vector<1x5x256xf32>,
    %78 = vector.extract_strided_slice %73 {offsets = [0, 256], sizes = [5, 256], strides = [1, 1]} : vector<5x512xf32> to vector<5x256xf32>
    %c1_45 = arith.constant 1 : index
    %c0_46 = arith.constant 0 : index
    %c0_47 = arith.constant 0 : index
    %79 = vector.load %arg4[%c1_45, %c0_46, %c0_47] : memref<2x5x256xf32, #tpu.memory_space<vmem>>, vector<1x5x256xf32>
    %80 = vector.shape_cast %79 : vector<1x5x256xf32> to vector<5x256xf32>
    %81 = vector.shape_cast %78 : vector<5x256xf32> to vector<1x5x256xf32>
    tpu.vector_store %arg4[%c1_45, %c0_46, %c0_47], %81 {strides = array<i32>} : memref<2x5x256xf32, #tpu.memory_space<vmem>>, vector<1x5x256xf32>,
    return
  }
}

</mosaic_0001>

<llo_original>
// kernel: subnet_forward.1
$region0: #{subnet_forward.1}
  #allocation0 [shape = 'u32[]', space=smem, size = 0x4, offset = 0x4, fixed_abs, tag = 'smem constant byte address 0x4 - core index']
  #allocation1 [shape = 'u32[72,128]{1,0:T(1,128)}', space=vmem, size = 0x9000, scoped, tag = 'internal scratch']
  #allocation2 [shape = 'f32[72,512]{1,0:T(8,128)}', space=vmem, size = 0x24000, scoped, tag = 'scratch operand']
  %s0 = inlined_call_operand.vmem [shape: f32[2,5,256], index: 0, kind: input, shape index: {}]
  %s1 = inlined_call_operand.vmem [shape: f32[5,72], index: 1, kind: input, shape index: {}]
  %s2 = inlined_call_operand.vmem [shape: f32[5,2], index: 2, kind: input, shape index: {}]
  %s3 = inlined_call_operand.vmem [shape: f32[9,512], index: 3, kind: input, shape index: {}]
  %s4 = inlined_call_operand.vmem [shape: f32[2,5,256], index: 4, kind: output, shape index: {}]
  %s5 = sld [smem:[#allocation0]]
  $region26: #{subnet_forward.1} parent=0
    _
  %s7 = ssub.s32 1, %s5
  %s8 = scalar_select 0, %s7, %s5
  // Predicated region
  $region2: #{subnet_forward.1} parent=0 // pred_check
    _
  $region3: #{subnet_forward.1} parent=0 // pred_check_branch
    %10 = sbr.rel (0) target = $region5
  $region4: #{subnet_forward.1} parent=0 // pred_region
    _
  $region5: #{subnet_forward.1} parent=0 // pred_fallthru
    _
  // Predicated region
  $region6: #{subnet_forward.1} parent=0 // pred_check
    _
  $region7: #{subnet_forward.1} parent=0 // pred_check_branch
    %12 = sbr.rel (0) target = $region9
  $region8: #{subnet_forward.1} parent=0 // pred_region
    _
  $region9: #{subnet_forward.1} parent=0 // pred_fallthru
    _
  // Predicated region
  $region10: #{subnet_forward.1} parent=0 // pred_check
    _
  $region11: #{subnet_forward.1} parent=0 // pred_check_branch
    %14 = sbr.rel (0) target = $region13
  $region12: #{subnet_forward.1} parent=0 // pred_region
    _
  $region13: #{subnet_forward.1} parent=0 // pred_fallthru
    _
  // Predicated region
  $region14: #{subnet_forward.1} parent=0 // pred_check
    _
  $region15: #{subnet_forward.1} parent=0 // pred_check_branch
    %16 = sbr.rel (0) target = $region17
  $region16: #{subnet_forward.1} parent=0 // pred_region
    _
  $region17: #{subnet_forward.1} parent=0 // pred_fallthru
    _
  %v17 = vld [vmem:[%s0] sm:$0x1f]
  %v18 = vld [vmem:[%s0 + $0x8] sm:$0x1f]
  %s19 = scalar_lea.vmem %s0, 16
  %v20 = vld [vmem:[%s19] sm:$0x1f]
  %v21 = vld [vmem:[%s19 + $0x8] sm:$0x1f]
  %22 = vst [vmem:[#allocation2] sm:$0xff] 0.0
  %23 = vst [vmem:[#allocation2 + $0x8] sm:$0xff] 0.0
  %24 = vst [vmem:[#allocation2 + $0x10] sm:$0xff] 0.0
  %25 = vst [vmem:[#allocation2 + $0x18] sm:$0xff] 0.0
  %26 = vst [vmem:[#allocation2 + $0x20] sm:$0xff] 0.0
  %27 = vst [vmem:[#allocation2 + $0x28] sm:$0xff] 0.0
  %28 = vst [vmem:[#allocation2 + $0x30] sm:$0xff] 0.0
  %29 = vst [vmem:[#allocation2 + $0x38] sm:$0xff] 0.0
  %30 = vst [vmem:[#allocation2 + $0x40] sm:$0xff] 0.0
  %31 = vst [vmem:[#allocation2 + $0x48] sm:$0xff] 0.0
  %32 = vst [vmem:[#allocation2 + $0x50] sm:$0xff] 0.0
  %33 = vst [vmem:[#allocation2 + $0x58] sm:$0xff] 0.0
  %34 = vst [vmem:[#allocation2 + $0x60] sm:$0xff] 0.0
  %35 = vst [vmem:[#allocation2 + $0x68] sm:$0xff] 0.0
  %36 = vst [vmem:[#allocation2 + $0x70] sm:$0xff] 0.0
  %37 = vst [vmem:[#allocation2 + $0x78] sm:$0xff] 0.0
  %38 = vst [vmem:[#allocation2 + $0x80] sm:$0xff] 0.0
  %39 = vst [vmem:[#allocation2 + $0x88] sm:$0xff] 0.0
  %40 = vst [vmem:[#allocation2 + $0x90] sm:$0xff] 0.0
  %41 = vst [vmem:[#allocation2 + $0x98] sm:$0xff] 0.0
  %42 = vst [vmem:[#allocation2 + $0xa0] sm:$0xff] 0.0
  %43 = vst [vmem:[#allocation2 + $0xa8] sm:$0xff] 0.0
  %44 = vst [vmem:[#allocation2 + $0xb0] sm:$0xff] 0.0
  %45 = vst [vmem:[#allocation2 + $0xb8] sm:$0xff] 0.0
  %46 = vst [vmem:[#allocation2 + $0xc0] sm:$0xff] 0.0
  %47 = vst [vmem:[#allocation2 + $0xc8] sm:$0xff] 0.0
  %48 = vst [vmem:[#allocation2 + $0xd0] sm:$0xff] 0.0
  %49 = vst [vmem:[#allocation2 + $0xd8] sm:$0xff] 0.0
  %50 = vst [vmem:[#allocation2 + $0xe0] sm:$0xff] 0.0
  %51 = vst [vmem:[#allocation2 + $0xe8] sm:$0xff] 0.0
  %52 = vst [vmem:[#allocation2 + $0xf0] sm:$0xff] 0.0
  %53 = vst [vmem:[#allocation2 + $0xf8] sm:$0xff] 0.0
  %54 = vst [vmem:[#allocation2 + $0x100] sm:$0xff] 0.0
  %55 = vst [vmem:[#allocation2 + $0x108] sm:$0xff] 0.0
  %56 = vst [vmem:[#allocation2 + $0x110] sm:$0xff] 0.0
  %57 = vst [vmem:[#allocation2 + $0x118] sm:$0xff] 0.0
  %58 = vrot.lane.b32.xlu0 %v17, 17
  %v59 = vpop.permute.xlu0 %58
  %60 = vrot.lane.b32.xlu0 %v18, 17
  %v61 = vpop.permute.xlu0 %60
  %62 = vrot.lane.b32.xlu0 %v20, 17
  %v63 = vpop.permute.xlu0 %62
  %64 = vrot.lane.b32.xlu0 %v21, 17
  %v65 = vpop.permute.xlu0 %64
  %v66 = vlaneseq
  %v67 = vand.u32 %v66, 127
  %vm68 = vcmp.lt.s32.totalorder %v67, 17
  %v69 = vsel %vm68, %v63, %v65
  %v70 = vsel %vm68, %v61, %v63
  %v71 = vsel %vm68, %v59, %v61
  %v72 = vsel %vm68, %v65, %v59
  %v73 = vld [vmem:[%s3] ss:$8 sm:$0xf]
  %v75 = vperm.slane %v73, 0
  %v76 = vperm.slane %v73, 1
  %v77 = vperm.slane %v73, 2
  %v78 = vperm.slane %v73, 3
  %v83 = vmul.f32 %v72, %v75
  %v84 = vmul.f32 %v71, %v76
  %v85 = vmul.f32 %v70, %v77
  %v86 = vmul.f32 %v69, %v78
  %87 = vst [vmem:[#allocation2] sm:$0x1f] %v83
  %88 = vst [vmem:[#allocation2 + $0x8] sm:$0x1f] %v84
  %89 = vst [vmem:[#allocation2 + $0x10] sm:$0x1f] %v85
  %90 = vst [vmem:[#allocation2 + $0x18] sm:$0x1f] %v86
  %91 = vrot.lane.b32.xlu0 %v17, 16
  %v92 = vpop.permute.xlu0 %91
  %93 = vrot.lane.b32.xlu0 %v18, 16
  %v94 = vpop.permute.xlu0 %93
  %95 = vrot.lane.b32.xlu0 %v20, 16
  %v96 = vpop.permute.xlu0 %95
  %97 = vrot.lane.b32.xlu0 %v21, 16
  %v98 = vpop.permute.xlu0 %97
  %vm99 = vcmp.lt.s32.totalorder %v67, 16
  %v100 = vsel %vm99, %v96, %v98
  %v101 = vsel %vm99, %v94, %v96
  %v102 = vsel %vm99, %v92, %v94
  %v103 = vsel %vm99, %v98, %v92
  %s104 = scalar_lea.vmem %s3, 1
  %v105 = vld [vmem:[%s104] ss:$8 sm:$0xf]
  %v107 = vperm.slane %v105, 0
  %v108 = vperm.slane %v105, 1
  %v109 = vperm.slane %v105, 2
  %v110 = vperm.slane %v105, 3
  %v115 = vmul.f32 %v103, %v107
  %v116 = vmul.f32 %v102, %v108
  %v117 = vmul.f32 %v101, %v109
  %v118 = vmul.f32 %v100, %v110
  %119 = vst [vmem:[#allocation2 + $0x20] sm:$0x1f] %v115
  %120 = vst [vmem:[#allocation2 + $0x28] sm:$0x1f] %v116
  %121 = vst [vmem:[#allocation2 + $0x30] sm:$0x1f] %v117
  %122 = vst [vmem:[#allocation2 + $0x38] sm:$0x1f] %v118
  %123 = vrot.lane.b32.xlu0 %v17, 15
  %v124 = vpop.permute.xlu0 %123
  %125 = vrot.lane.b32.xlu0 %v18, 15
  %v126 = vpop.permute.xlu0 %125
  %127 = vrot.lane.b32.xlu0 %v20, 15
  %v128 = vpop.permute.xlu0 %127
  %129 = vrot.lane.b32.xlu0 %v21, 15
  %v130 = vpop.permute.xlu0 %129
  %vm131 = vcmp.lt.s32.totalorder %v67, 15
  %v132 = vsel %vm131, %v128, %v130
  %v133 = vsel %vm131, %v126, %v128
  %v134 = vsel %vm131, %v124, %v126
  %v135 = vsel %vm131, %v130, %v124
  %s136 = scalar_lea.vmem %s3, 2
  %v137 = vld [vmem:[%s136] ss:$8 sm:$0xf]
  %v139 = vperm.slane %v137, 0
  %v140 = vperm.slane %v137, 1
  %v141 = vperm.slane %v137, 2
  %v142 = vperm.slane %v137, 3
  %v147 = vmul.f32 %v135, %v139
  %v148 = vmul.f32 %v134, %v140
  %v149 = vmul.f32 %v133, %v141
  %v150 = vmul.f32 %v132, %v142
  %151 = vst [vmem:[#allocation2 + $0x40] sm:$0x1f] %v147
  %152 = vst [vmem:[#allocation2 + $0x48] sm:$0x1f] %v148
  %153 = vst [vmem:[#allocation2 + $0x50] sm:$0x1f] %v149
  %154 = vst [vmem:[#allocation2 + $0x58] sm:$0x1f] %v150
  %155 = vrot.lane.b32.xlu0 %v17, 1
  %v156 = vpop.permute.xlu0 %155
  %157 = vrot.lane.b32.xlu0 %v18, 1
  %v158 = vpop.permute.xlu0 %157
  %159 = vrot.lane.b32.xlu0 %v20, 1
  %v160 = vpop.permute.xlu0 %159
  %161 = vrot.lane.b32.xlu0 %v21, 1
  %v162 = vpop.permute.xlu0 %161
  %vm163 = vcmp.lt.s32.totalorder %v67, 1
  %v164 = vsel %vm163, %v160, %v162
  %v165 = vsel %vm163, %v158, %v160
  %v166 = vsel %vm163, %v156, %v158
  %v167 = vsel %vm163, %v162, %v156
  %s168 = scalar_lea.vmem %s3, 3
  %v169 = vld [vmem:[%s168] ss:$8 sm:$0xf]
  %v171 = vperm.slane %v169, 0
  %v172 = vperm.slane %v169, 1
  %v173 = vperm.slane %v169, 2
  %v174 = vperm.slane %v169, 3
  %v179 = vmul.f32 %v167, %v171
  %v180 = vmul.f32 %v166, %v172
  %v181 = vmul.f32 %v165, %v173
  %v182 = vmul.f32 %v164, %v174
  %183 = vst [vmem:[#allocation2 + $0x60] sm:$0x1f] %v179
  %184 = vst [vmem:[#allocation2 + $0x68] sm:$0x1f] %v180
  %185 = vst [vmem:[#allocation2 + $0x70] sm:$0x1f] %v181
  %186 = vst [vmem:[#allocation2 + $0x78] sm:$0x1f] %v182
  %187 = vst [vmem:[#allocation2 + $0x80] sm:$0x1f] %v17
  %188 = vst [vmem:[#allocation2 + $0x88] sm:$0x1f] %v18
  %189 = vst [vmem:[#allocation2 + $0x90] sm:$0x1f] %v20
  %190 = vst [vmem:[#allocation2 + $0x98] sm:$0x1f] %v21
  %191 = vrot.lane.b32.xlu0 %v17, 127
  %v192 = vpop.permute.xlu0 %191
  %193 = vrot.lane.b32.xlu0 %v18, 127
  %v194 = vpop.permute.xlu0 %193
  %195 = vrot.lane.b32.xlu0 %v20, 127
  %v196 = vpop.permute.xlu0 %195
  %197 = vrot.lane.b32.xlu0 %v21, 127
  %v198 = vpop.permute.xlu0 %197
  %vm199 = vcmp.lt.s32.totalorder %v67, 127
  %v200 = vsel %vm199, %v196, %v198
  %v201 = vsel %vm199, %v194, %v196
  %v202 = vsel %vm199, %v192, %v194
  %v203 = vsel %vm199, %v198, %v192
  %s204 = scalar_lea.vmem %s3, 5
  %v205 = vld [vmem:[%s204] ss:$8 sm:$0xf]
  %v207 = vperm.slane %v205, 0
  %v208 = vperm.slane %v205, 1
  %v209 = vperm.slane %v205, 2
  %v210 = vperm.slane %v205, 3
  %v215 = vmul.f32 %v202, %v207
  %v216 = vmul.f32 %v201, %v208
  %v217 = vmul.f32 %v200, %v209
  %v218 = vmul.f32 %v203, %v210
  %219 = vst [vmem:[#allocation2 + $0xa0] sm:$0x1f] %v215
  %220 = vst [vmem:[#allocation2 + $0xa8] sm:$0x1f] %v216
  %221 = vst [vmem:[#allocation2 + $0xb0] sm:$0x1f] %v217
  %222 = vst [vmem:[#allocation2 + $0xb8] sm:$0x1f] %v218
  %223 = vrot.lane.b32.xlu0 %v17, 113
  %v224 = vpop.permute.xlu0 %223
  %225 = vrot.lane.b32.xlu0 %v18, 113
  %v226 = vpop.permute.xlu0 %225
  %227 = vrot.lane.b32.xlu0 %v20, 113
  %v228 = vpop.permute.xlu0 %227
  %229 = vrot.lane.b32.xlu0 %v21, 113
  %v230 = vpop.permute.xlu0 %229
  %vm231 = vcmp.lt.s32.totalorder %v67, 113
  %v232 = vsel %vm231, %v228, %v230
  %v233 = vsel %vm231, %v226, %v228
  %v234 = vsel %vm231, %v224, %v226
  %v235 = vsel %vm231, %v230, %v224
  %s236 = scalar_lea.vmem %s3, 6
  %v237 = vld [vmem:[%s236] ss:$8 sm:$0xf]
  %v239 = vperm.slane %v237, 0
  %v240 = vperm.slane %v237, 1
  %v241 = vperm.slane %v237, 2
  %v242 = vperm.slane %v237, 3
  %v247 = vmul.f32 %v234, %v239
  %v248 = vmul.f32 %v233, %v240
  %v249 = vmul.f32 %v232, %v241
  %v250 = vmul.f32 %v235, %v242
  %251 = vst [vmem:[#allocation2 + $0xc0] sm:$0x1f] %v247
  %252 = vst [vmem:[#allocation2 + $0xc8] sm:$0x1f] %v248
  %253 = vst [vmem:[#allocation2 + $0xd0] sm:$0x1f] %v249
  %254 = vst [vmem:[#allocation2 + $0xd8] sm:$0x1f] %v250
  %255 = vrot.lane.b32.xlu0 %v17, 112
  %v256 = vpop.permute.xlu0 %255
  %257 = vrot.lane.b32.xlu0 %v18, 112
  %v258 = vpop.permute.xlu0 %257
  %259 = vrot.lane.b32.xlu0 %v20, 112
  %v260 = vpop.permute.xlu0 %259
  %261 = vrot.lane.b32.xlu0 %v21, 112
  %v262 = vpop.permute.xlu0 %261
  %vm263 = vcmp.lt.s32.totalorder %v67, 112
  %v264 = vsel %vm263, %v260, %v262
  %v265 = vsel %vm263, %v258, %v260
  %v266 = vsel %vm263, %v256, %v258
  %v267 = vsel %vm263, %v262, %v256
  %s268 = scalar_lea.vmem %s3, 7
  %v269 = vld [vmem:[%s268] ss:$8 sm:$0xf]
  %v271 = vperm.slane %v269, 0
  %v272 = vperm.slane %v269, 1
  %v273 = vperm.slane %v269, 2
  %v274 = vperm.slane %v269, 3
  %v279 = vmul.f32 %v266, %v271
  %v280 = vmul.f32 %v265, %v272
  %v281 = vmul.f32 %v264, %v273
  %v282 = vmul.f32 %v267, %v274
  %283 = vst [vmem:[#allocation2 + $0xe0] sm:$0x1f] %v279
  %284 = vst [vmem:[#allocation2 + $0xe8] sm:$0x1f] %v280
  %285 = vst [vmem:[#allocation2 + $0xf0] sm:$0x1f] %v281
  %286 = vst [vmem:[#allocation2 + $0xf8] sm:$0x1f] %v282
  %287 = vrot.lane.b32.xlu0 %v17, 111
  %v288 = vpop.permute.xlu0 %287
  %289 = vrot.lane.b32.xlu0 %v18, 111
  %v290 = vpop.permute.xlu0 %289
  %291 = vrot.lane.b32.xlu0 %v20, 111
  %v292 = vpop.permute.xlu0 %291
  %293 = vrot.lane.b32.xlu0 %v21, 111
  %v294 = vpop.permute.xlu0 %293
  %vm295 = vcmp.lt.s32.totalorder %v67, 111
  %v296 = vsel %vm295, %v292, %v294
  %v297 = vsel %vm295, %v290, %v292
  %v298 = vsel %vm295, %v288, %v290
  %v299 = vsel %vm295, %v294, %v288
  %s300 = scalar_lea.vmem %s3, 32
  %v301 = vld [vmem:[%s300] ss:$8 sm:$0xf]
  %v303 = vperm.slane %v301, 0
  %v304 = vperm.slane %v301, 1
  %v305 = vperm.slane %v301, 2
  %v306 = vperm.slane %v301, 3
  %v311 = vmul.f32 %v298, %v303
  %v312 = vmul.f32 %v297, %v304
  %v313 = vmul.f32 %v296, %v305
  %v314 = vmul.f32 %v299, %v306
  %315 = vst [vmem:[#allocation2 + $0x100] sm:$0x1f] %v311
  %316 = vst [vmem:[#allocation2 + $0x108] sm:$0x1f] %v312
  %317 = vst [vmem:[#allocation2 + $0x110] sm:$0x1f] %v313
  %318 = vst [vmem:[#allocation2 + $0x118] sm:$0x1f] %v314
  %v319 = vld [vmem:[%s1] sm:$0x1f]
  %v320 = vld [vmem:[#allocation2] sm:$0xff]
  %v321 = vld [vmem:[#allocation2 + $0x8] sm:$0xff]
  %v322 = vld [vmem:[#allocation2 + $0x10] sm:$0xff]
  %v323 = vld [vmem:[#allocation2 + $0x18] sm:$0xff]
  %v324 = vld [vmem:[#allocation2 + $0x20] sm:$0xff]
  %v325 = vld [vmem:[#allocation2 + $0x28] sm:$0xff]
  %v326 = vld [vmem:[#allocation2 + $0x30] sm:$0xff]
  %v327 = vld [vmem:[#allocation2 + $0x38] sm:$0xff]
  %v328 = vld [vmem:[#allocation2 + $0x40] sm:$0xff]
  %v329 = vld [vmem:[#allocation2 + $0x48] sm:$0xff]
  %v330 = vld [vmem:[#allocation2 + $0x50] sm:$0xff]
  %v331 = vld [vmem:[#allocation2 + $0x58] sm:$0xff]
  %v332 = vld [vmem:[#allocation2 + $0x60] sm:$0xff]
  %v333 = vld [vmem:[#allocation2 + $0x68] sm:$0xff]
  %v334 = vld [vmem:[#allocation2 + $0x70] sm:$0xff]
  %v335 = vld [vmem:[#allocation2 + $0x78] sm:$0xff]
  %v336 = vld [vmem:[#allocation2 + $0x80] sm:$0xff]
  %v337 = vld [vmem:[#allocation2 + $0x88] sm:$0xff]
  %v338 = vld [vmem:[#allocation2 + $0x90] sm:$0xff]
  %v339 = vld [vmem:[#allocation2 + $0x98] sm:$0xff]
  %v340 = vld [vmem:[#allocation2 + $0xa0] sm:$0xff]
  %v341 = vld [vmem:[#allocation2 + $0xa8] sm:$0xff]
  %v342 = vld [vmem:[#allocation2 + $0xb0] sm:$0xff]
  %v343 = vld [vmem:[#allocation2 + $0xb8] sm:$0xff]
  %v344 = vld [vmem:[#allocation2 + $0xc0] sm:$0xff]
  %v345 = vld [vmem:[#allocation2 + $0xc8] sm:$0xff]
  %v346 = vld [vmem:[#allocation2 + $0xd0] sm:$0xff]
  %v347 = vld [vmem:[#allocation2 + $0xd8] sm:$0xff]
  %v348 = vld [vmem:[#allocation2 + $0xe0] sm:$0xff]
  %v349 = vld [vmem:[#allocation2 + $0xe8] sm:$0xff]
  %v350 = vld [vmem:[#allocation2 + $0xf0] sm:$0xff]
  %v351 = vld [vmem:[#allocation2 + $0xf8] sm:$0xff]
  %v352 = vld [vmem:[#allocation2 + $0x100] sm:$0xff]
  %v353 = vld [vmem:[#allocation2 + $0x108] sm:$0xff]
  %v354 = vld [vmem:[#allocation2 + $0x110] sm:$0xff]
  %v355 = vld [vmem:[#allocation2 + $0x118] sm:$0xff]
  %vm356 = vcmask 588800
  %v358 = vsel %vm356, %v319, 0
  %360 = vmatpush.msra.mxu0 0.0
  %361 = vmatpush.msra.mxu0 0.0
  %362 = vmatpush.msra.mxu0 0.0
  %363 = vmatpush.msra.mxu0 0.0
  %364 = vmatpush.msra.mxu0 0.0
  %365 = vmatpush.msra.mxu0 0.0
  %366 = vmatpush.msra.mxu0 0.0
  %367 = vmatpush.msra.mxu0 %v352
  %368 = vmatpush.msra.mxu0 %v348
  %369 = vmatpush.msra.mxu0 %v344
  %370 = vmatpush.msra.mxu0 %v340
  %371 = vmatpush.msra.mxu0 %v336
  %372 = vmatpush.msra.mxu0 %v332
  %373 = vmatpush.msra.mxu0 %v328
  %374 = vmatpush.msra.mxu0 %v324
  %375 = vmatpush.msra.mxu0 %v320
  %376 = vmatmul.f32.gmra.mxu0 %v358
  %v377 = vpop.f32.mrf.mxu0
  %v378 = vadd.f32 0.0, %v377
  %379 = vdwg.mxu0
  %380 = vmatpush.msra.mxu0 0.0
  %381 = vmatpush.msra.mxu0 0.0
  %382 = vmatpush.msra.mxu0 0.0
  %383 = vmatpush.msra.mxu0 0.0
  %384 = vmatpush.msra.mxu0 0.0
  %385 = vmatpush.msra.mxu0 0.0
  %386 = vmatpush.msra.mxu0 0.0
  %387 = vmatpush.msra.mxu0 %v353
  %388 = vmatpush.msra.mxu0 %v349
  %389 = vmatpush.msra.mxu0 %v345
  %390 = vmatpush.msra.mxu0 %v341
  %391 = vmatpush.msra.mxu0 %v337
  %392 = vmatpush.msra.mxu0 %v333
  %393 = vmatpush.msra.mxu0 %v329
  %394 = vmatpush.msra.mxu0 %v325
  %395 = vmatpush.msra.mxu0 %v321
  %396 = vmatmul.f32.gmra.mxu0 %v358
  %v397 = vpop.f32.mrf.mxu0
  %v398 = vadd.f32 0.0, %v397
  %399 = vdwg.mxu0
  %400 = vmatpush.msra.mxu0 0.0
  %401 = vmatpush.msra.mxu0 0.0
  %402 = vmatpush.msra.mxu0 0.0
  %403 = vmatpush.msra.mxu0 0.0
  %404 = vmatpush.msra.mxu0 0.0
  %405 = vmatpush.msra.mxu0 0.0
  %406 = vmatpush.msra.mxu0 0.0
  %407 = vmatpush.msra.mxu0 %v354
  %408 = vmatpush.msra.mxu0 %v350
  %409 = vmatpush.msra.mxu0 %v346
  %410 = vmatpush.msra.mxu0 %v342
  %411 = vmatpush.msra.mxu0 %v338
  %412 = vmatpush.msra.mxu0 %v334
  %413 = vmatpush.msra.mxu0 %v330
  %414 = vmatpush.msra.mxu0 %v326
  %415 = vmatpush.msra.mxu0 %v322
  %416 = vmatmul.f32.gmra.mxu0 %v358
  %v417 = vpop.f32.mrf.mxu0
  %v418 = vadd.f32 0.0, %v417
  %419 = vdwg.mxu0
  %420 = vmatpush.msra.mxu0 0.0
  %421 = vmatpush.msra.mxu0 0.0
  %422 = vmatpush.msra.mxu0 0.0
  %423 = vmatpush.msra.mxu0 0.0
  %424 = vmatpush.msra.mxu0 0.0
  %425 = vmatpush.msra.mxu0 0.0
  %426 = vmatpush.msra.mxu0 0.0
  %427 = vmatpush.msra.mxu0 %v355
  %428 = vmatpush.msra.mxu0 %v351
  %429 = vmatpush.msra.mxu0 %v347
  %430 = vmatpush.msra.mxu0 %v343
  %431 = vmatpush.msra.mxu0 %v339
  %432 = vmatpush.msra.mxu0 %v335
  %433 = vmatpush.msra.mxu0 %v331
  %434 = vmatpush.msra.mxu0 %v327
  %435 = vmatpush.msra.mxu0 %v323
  %436 = vmatmul.f32.gmra.mxu0 %v358
  %v437 = vpop.f32.mrf.mxu0
  %v438 = vadd.f32 0.0, %v437
  %439 = vdwg.mxu0
  %vm440 = vcmask 1044480
  %v441 = vsel %vm440, %v378, 0.0
  %v442 = vsel %vm440, %v398, 0.0
  %v443 = vadd.f32 %v441, %v442
  %v444 = vsel %vm440, %v418, 0.0
  %v445 = vadd.f32 %v443, %v444
  %v446 = vsel %vm440, %v438, 0.0
  %v447 = vadd.f32 %v445, %v446
  %448 = vadd.xlane.f32.xlu0 %v447
  %v449 = vpop.xlane.xlu0 %448
  %v450 = vmul.f32 %v449, 0.001953125
  %v451 = vsub.f32 %v378, %v450
  %v452 = vsub.f32 %v398, %v450
  %v453 = vsub.f32 %v418, %v450
  %v454 = vsub.f32 %v438, %v450
  %v455 = vmul.f32 %v451, %v451
  %v456 = vmul.f32 %v452, %v452
  %v457 = vmul.f32 %v453, %v453
  %v458 = vmul.f32 %v454, %v454
  %v459 = vsel %vm440, %v455, 0.0
  %v460 = vsel %vm440, %v456, 0.0
  %v461 = vadd.f32 %v459, %v460
  %v462 = vsel %vm440, %v457, 0.0
  %v463 = vadd.f32 %v461, %v462
  %v464 = vsel %vm440, %v458, 0.0
  %v465 = vadd.f32 %v463, %v464
  %466 = vadd.xlane.f32.xlu0 %v465
  %v467 = vpop.xlane.xlu0 %466
  %v468 = vmul.f32 %v467, 0.001953125
  %v469 = vld [vmem:[%s2] sm:$0x1f]
  %v470 = vadd.f32 %v468, 1e-05
  %v471 = vrsqrt.pop %v470
  %v472 = vmul.f32 %v471, %v470
  %v473 = vmul.f32 %v472, %v471
  %v474 = vmul.f32 0.5, %v473
  %v475 = vsub.f32 1.5, %v474
  %v476 = vmul.f32 %v471, %v475
  %vm477 = vweird.f32 %v470
  %vm478 = vweird.f32 %v471
  %vm479 = vmor %vm477, %vm478
  %v480 = vsel %vm479, %v471, %v476
  %v481 = vmul.f32 %v469, %v480
  %483 = vset.pattern.permute.xlu0 0
  %484 = vperm.xlu0 %483, %v481
  %v485 = vpop.permute.xlu0 %484
  %v487 = vmul.f32 %v451, %v485
  %v488 = vmul.f32 %v452, %v485
  %v489 = vmul.f32 %v453, %v485
  %v490 = vmul.f32 %v454, %v485
  %492 = vset.pattern.permute.xlu0 1
  %493 = vperm.xlu0 %492, %v469
  %v494 = vpop.permute.xlu0 %493
  %v496 = vadd.f32 %v487, %v494
  %v497 = vadd.f32 %v488, %v494
  %v498 = vadd.f32 %v489, %v494
  %v499 = vadd.f32 %v490, %v494
  %v500 = vmax.f32 %v496, 0.0
  %v501 = vmax.f32 %v497, 0.0
  %v502 = vmax.f32 %v498, 0.0
  %v503 = vmax.f32 %v499, 0.0
  %504 = vst [vmem:[%s4] sm:$0x1f] %v500
  %505 = vst [vmem:[%s4 + $0x8] sm:$0x1f] %v501
  %s506 = scalar_lea.vmem %s4, 16
  %507 = vst [vmem:[%s506] sm:$0x1f] %v502
  %508 = vst [vmem:[%s506 + $0x8] sm:$0x1f] %v503
  // Predicated region
  $region18: #{subnet_forward.1} parent=0 // pred_check
    _
  $region19: #{subnet_forward.1} parent=0 // pred_check_branch
    %510 = sbr.rel (0) target = $region21
  $region20: #{subnet_forward.1} parent=0 // pred_region
    _
  $region21: #{subnet_forward.1} parent=0 // pred_fallthru
    _
  // Predicated region
  $region22: #{subnet_forward.1} parent=0 // pred_check
    _
  $region23: #{subnet_forward.1} parent=0 // pred_check_branch
    %512 = sbr.rel (0) target = $region25
  $region24: #{subnet_forward.1} parent=0 // pred_region
    _
  $region25: #{subnet_forward.1} parent=0 // pred_fallthru
    _

</llo_original>
